<compile_context>
chip_gen: v7x
topology: tpu7x:2x2x1
jax: 0.10.0
libtpu: 0.0.40
codegen_flags: <defaults>
</compile_context>

<pallas_src>
import functools

import jax
import jax.numpy as jnp
from jax.experimental import pallas as pl
from jax.experimental.pallas import tpu as pltpu


def _round_up(v: int, m: int) -> int:
    return ((v + m - 1) // m) * m


def _glu_kernel(x_ref, wa_ref, wb_ref, o_ref, acc_a, acc_b):
    """One (tm, tn) output tile; accumulates over the K grid axis, applies GLU at the end."""
    k = pl.program_id(2)

    @pl.when(k == 0)
    def _():
        acc_a[...] = jnp.zeros_like(acc_a)
        acc_b[...] = jnp.zeros_like(acc_b)

    x = x_ref[...]
    acc_a[...] += jnp.dot(x, wa_ref[...], preferred_element_type=jnp.float32)
    acc_b[...] += jnp.dot(x, wb_ref[...], preferred_element_type=jnp.float32)

    @pl.when(k == pl.num_programs(2) - 1)
    def _():
        a = acc_a[...]
        b = acc_b[...]
        # GLU: value * sigmoid(gate). sigmoid lowers to the EUP (exp) path.
        o_ref[...] = (a * jax.nn.sigmoid(b)).astype(o_ref.dtype)


@functools.partial(jax.jit, static_argnames=("tm", "tn", "tk"))
def glu_layer(x, weight, *, tm: int = 256, tn: int = 256, tk: int = 512):
    """GLULayer forward.

    x      : (N, in_channels)
    weight : (2*out_channels, in_channels)   -- PyTorch Linear weight layout (no bias)
    returns: (N, out_channels)
    """
    n, k = x.shape
    two_oc, k_w = weight.shape
    assert k_w == k, "weight in_features mismatch"
    assert two_oc % 2 == 0, "Linear out_features must be 2*out_channels"
    oc = two_oc // 2

    # Weight^T split into value / gate halves: (K, OC) each.
    wt = weight.T
    wa = wt[:, :oc]
    wb = wt[:, oc:]

    # Tile sizes: tm multiple of 8; tn, tk multiples of 128 (lane-dense, (8,128)-aligned).
    tm = min(tm, _round_up(n, 8))
    tn = min(tn, _round_up(oc, 128))
    tk = min(tk, _round_up(k, 128))

    mp = _round_up(n, tm)
    kp = _round_up(k, tk)
    ocp = _round_up(oc, tn)

    # Single zero-pad (zeros contribute nothing to the matmul); sliced away at the end.
    if (mp, kp) != (n, k):
        x = jnp.pad(x, ((0, mp - n), (0, kp - k)))
    if (kp, ocp) != (k, oc):
        wa = jnp.pad(wa, ((0, kp - k), (0, ocp - oc)))
        wb = jnp.pad(wb, ((0, kp - k), (0, ocp - oc)))

    grid = (mp // tm, ocp // tn, kp // tk)

    out_padded = pl.pallas_call(
        _glu_kernel,
        out_shape=jax.ShapeDtypeStruct((mp, ocp), x.dtype),
        grid_spec=pltpu.PrefetchScalarGridSpec(
            num_scalar_prefetch=0,
            grid=grid,
            in_specs=[
                pl.BlockSpec((tm, tk), lambda i, j, kk: (i, kk)),   # x tile
                pl.BlockSpec((tk, tn), lambda i, j, kk: (kk, j)),   # Wa tile
                pl.BlockSpec((tk, tn), lambda i, j, kk: (kk, j)),   # Wb tile
            ],
            out_specs=pl.BlockSpec((tm, tn), lambda i, j, kk: (i, j)),
            scratch_shapes=[
                pltpu.VMEM((tm, tn), jnp.float32),  # value accumulator
                pltpu.VMEM((tm, tn), jnp.float32),  # gate accumulator
            ],
        ),
        compiler_params=pltpu.CompilerParams(
            dimension_semantics=("parallel", "parallel", "arbitrary"),
            vmem_limit_bytes=64 * 1024 * 1024,  # sized well under v7x's 64 MiB VMEM
        ),
    )(x, wa, wb)

    return out_padded[:n, :oc]


def _reference(x, weight):
    oc = weight.shape[0] // 2
    z = jnp.dot(x.astype(jnp.float32), weight.T.astype(jnp.float32))
    a, b = z[:, :oc], z[:, oc:]
    return (a * jax.nn.sigmoid(b)).astype(x.dtype)


if __name__ == "__main__":
    key = jax.random.PRNGKey(0)
    N, IN_C, OUT_C = 16, 32, 32          # small shapes consistent with GLULayer
    kx, kw = jax.random.split(key, 2)

    x = jax.random.normal(kx, (N, IN_C), dtype=jnp.float32)
    # Linear.reset_parameters(): kaiming-uniform-ish scale; deterministic via PRNGKey(0).
    bound = 1.0 / (IN_C ** 0.5)
    weight = jax.random.uniform(kw, (2 * OUT_C, IN_C), dtype=jnp.float32,
                                minval=-bound, maxval=bound)

    out = glu_layer(x, weight)
    out = jax.block_until_ready(out)

    ref = _reference(x, weight)
    assert out.shape == (N, OUT_C)
    assert jnp.allclose(out, ref, atol=1e-5, rtol=1e-5), "mismatch vs reference"
    print("KERNEL_OK")
</pallas_src>

<mosaic_0001>
module attributes {stable_mosaic.version = 11 : i64} {
  func.func @_glu_kernel(%arg0: i32, %arg1: i32, %arg2: i32, %arg3: memref<16x128xf32, #tpu.memory_space<vmem>>, %arg4: memref<128x128xf32, #tpu.memory_space<vmem>>, %arg5: memref<128x128xf32, #tpu.memory_space<vmem>>, %arg6: memref<16x128xf32, #tpu.memory_space<vmem>>, %arg7: memref<16x128xf32, #tpu.memory_space<vmem>>, %arg8: memref<16x128xf32, #tpu.memory_space<vmem>>) attributes {dimension_semantics = [#tpu.dimension_semantics<parallel>, #tpu.dimension_semantics<parallel>, #tpu.dimension_semantics<arbitrary>], iteration_bounds = array<i64: 1, 1, 1>, scalar_prefetch = 0 : i64, scratch_operands = 2 : i64, tpu.core_type = #tpu.core_type<tc>, window_params = [{transform_indices = @transform_0, window_bounds = array<i64: 16, 128>}, {transform_indices = @transform_1, window_bounds = array<i64: 128, 128>}, {transform_indices = @transform_2, window_bounds = array<i64: 128, 128>}, {transform_indices = @transform_3, window_bounds = array<i64: 16, 128>}]} {
    %c0_i32 = arith.constant 0 : i32
    %0 = arith.cmpi eq, %arg2, %c0_i32 : i32
    %1 = arith.extui %0 : i1 to i32
    %c0_i32_0 = arith.constant 0 : i32
    %2 = arith.cmpi ne, %1, %c0_i32_0 : i32
    scf.if %2 {
      %cst_17 = arith.constant 0.000000e+00 : f32
      %17 = vector.broadcast %cst_17 : f32 to vector<16x128xf32>
      %c0_18 = arith.constant 0 : index
      %c0_19 = arith.constant 0 : index
      %18 = vector.load %arg7[%c0_18, %c0_19] : memref<16x128xf32, #tpu.memory_space<vmem>>, vector<16x128xf32>
      tpu.vector_store %arg7[%c0_18, %c0_19], %17 {strides = array<i32>} : memref<16x128xf32, #tpu.memory_space<vmem>>, vector<16x128xf32>,
      %cst_20 = arith.constant 0.000000e+00 : f32
      %19 = vector.broadcast %cst_20 : f32 to vector<16x128xf32>
      %c0_21 = arith.constant 0 : index
      %c0_22 = arith.constant 0 : index
      %20 = vector.load %arg8[%c0_21, %c0_22] : memref<16x128xf32, #tpu.memory_space<vmem>>, vector<16x128xf32>
      tpu.vector_store %arg8[%c0_21, %c0_22], %19 {strides = array<i32>} : memref<16x128xf32, #tpu.memory_space<vmem>>, vector<16x128xf32>,
    } else {
    }
    %c0 = arith.constant 0 : index
    %c0_1 = arith.constant 0 : index
    %3 = vector.load %arg3[%c0, %c0_1] : memref<16x128xf32, #tpu.memory_space<vmem>>, vector<16x128xf32>
    %c0_2 = arith.constant 0 : index
    %c0_3 = arith.constant 0 : index
    %4 = vector.load %arg7[%c0_2, %c0_3] : memref<16x128xf32, #tpu.memory_space<vmem>>, vector<16x128xf32>
    %c0_4 = arith.constant 0 : index
    %c0_5 = arith.constant 0 : index
    %5 = vector.load %arg4[%c0_4, %c0_5] : memref<128x128xf32, #tpu.memory_space<vmem>>, vector<128x128xf32>
    %cst = arith.constant dense<0.000000e+00> : vector<16x128xf32>
    %6 = tpu.matmul %3, %5, %cst {dimension_numbers = #tpu.dot_dimension_numbers<[1], [0], [0], [1], [0, 0, 1, 1], [], []>} : vector<16x128xf32>, vector<128x128xf32>, vector<16x128xf32> -> vector<16x128xf32>
    %7 = arith.addf %4, %6 : vector<16x128xf32>
    %c0_6 = arith.constant 0 : index
    %c0_7 = arith.constant 0 : index
    %8 = vector.load %arg7[%c0_6, %c0_7] : memref<16x128xf32, #tpu.memory_space<vmem>>, vector<16x128xf32>
    tpu.vector_store %arg7[%c0_6, %c0_7], %7 {strides = array<i32>} : memref<16x128xf32, #tpu.memory_space<vmem>>, vector<16x128xf32>,
    %c0_8 = arith.constant 0 : index
    %c0_9 = arith.constant 0 : index
    %9 = vector.load %arg8[%c0_8, %c0_9] : memref<16x128xf32, #tpu.memory_space<vmem>>, vector<16x128xf32>
    %c0_10 = arith.constant 0 : index
    %c0_11 = arith.constant 0 : index
    %10 = vector.load %arg5[%c0_10, %c0_11] : memref<128x128xf32, #tpu.memory_space<vmem>>, vector<128x128xf32>
    %cst_12 = arith.constant dense<0.000000e+00> : vector<16x128xf32>
    %11 = tpu.matmul %3, %10, %cst_12 {dimension_numbers = #tpu.dot_dimension_numbers<[1], [0], [0], [1], [0, 0, 1, 1], [], []>} : vector<16x128xf32>, vector<128x128xf32>, vector<16x128xf32> -> vector<16x128xf32>
    %12 = arith.addf %9, %11 : vector<16x128xf32>
    %c0_13 = arith.constant 0 : index
    %c0_14 = arith.constant 0 : index
    %13 = vector.load %arg8[%c0_13, %c0_14] : memref<16x128xf32, #tpu.memory_space<vmem>>, vector<16x128xf32>
    tpu.vector_store %arg8[%c0_13, %c0_14], %12 {strides = array<i32>} : memref<16x128xf32, #tpu.memory_space<vmem>>, vector<16x128xf32>,
    %c0_i32_15 = arith.constant 0 : i32
    %14 = arith.cmpi eq, %arg2, %c0_i32_15 : i32
    %15 = arith.extui %14 : i1 to i32
    %c0_i32_16 = arith.constant 0 : i32
    %16 = arith.cmpi ne, %15, %c0_i32_16 : i32
    scf.if %16 {
      %c0_17 = arith.constant 0 : index
      %c0_18 = arith.constant 0 : index
      %17 = vector.load %arg7[%c0_17, %c0_18] : memref<16x128xf32, #tpu.memory_space<vmem>>, vector<16x128xf32>
      %c0_19 = arith.constant 0 : index
      %c0_20 = arith.constant 0 : index
      %18 = vector.load %arg8[%c0_19, %c0_20] : memref<16x128xf32, #tpu.memory_space<vmem>>, vector<16x128xf32>
      %19 = arith.negf %18 : vector<16x128xf32>
      %20 = math.exp %19 : vector<16x128xf32>
      %cst_21 = arith.constant 1.000000e+00 : f32
      %21 = vector.broadcast %cst_21 : f32 to vector<16x128xf32>
      %22 = arith.addf %21, %20 : vector<16x128xf32>
      %23 = arith.divf %21, %22 : vector<16x128xf32>
      %24 = arith.mulf %17, %23 : vector<16x128xf32>
      %c0_22 = arith.constant 0 : index
      %c0_23 = arith.constant 0 : index
      %25 = vector.load %arg6[%c0_22, %c0_23] : memref<16x128xf32, #tpu.memory_space<vmem>>, vector<16x128xf32>
      tpu.vector_store %arg6[%c0_22, %c0_23], %24 {strides = array<i32>} : memref<16x128xf32, #tpu.memory_space<vmem>>, vector<16x128xf32>,
    } else {
    }
    return
  }
  func.func @transform_0(%arg0: i32, %arg1: i32, %arg2: i32) -> (i32, i32) {
    %c0_i32 = arith.constant 0 : i32
    return %arg0, %arg2 : i32, i32
  }
  func.func @transform_1(%arg0: i32, %arg1: i32, %arg2: i32) -> (i32, i32) {
    %c0_i32 = arith.constant 0 : i32
    return %arg2, %arg1 : i32, i32
  }
  func.func @transform_2(%arg0: i32, %arg1: i32, %arg2: i32) -> (i32, i32) {
    %c0_i32 = arith.constant 0 : i32
    return %arg2, %arg1 : i32, i32
  }
  func.func @transform_3(%arg0: i32, %arg1: i32, %arg2: i32) -> (i32, i32) {
    %c0_i32 = arith.constant 0 : i32
    return %arg0, %arg1 : i32, i32
  }
}

</mosaic_0001>

<llo_original>
// kernel: glu_layer.1
$region0: #{glu_layer.1}
  #allocation0 [shape = 'u32[]', space=smem, size = 0x4, offset = 0x4, fixed_abs, tag = 'smem constant byte address 0x4 - core index']
  #allocation1 [shape = 'u32[144,128]{1,0:T(1,128)}', space=vmem, size = 0x12000, scoped, tag = 'internal scratch']
  #allocation2 [shape = 'f32[16,128]{1,0:T(8,128)}', space=vmem, size = 0x2000, scoped, tag = 'scratch operand']
  #allocation3 [shape = 'f32[16,128]{1,0:T(8,128)}', space=vmem, size = 0x2000, scoped, tag = 'scratch operand']
  %s0 = inlined_call_operand.hbm [shape: f32[16,128], index: 0, kind: input, shape index: {}]
  %s1 = inlined_call_operand.hbm [shape: f32[128,128], index: 1, kind: input, shape index: {}]
  %s2 = inlined_call_operand.hbm [shape: f32[128,128], index: 2, kind: input, shape index: {}]
  %s3 = inlined_call_operand.hbm [shape: f32[16,128], index: 3, kind: output, shape index: {}]
  %s4 = sld [smem:[#allocation0]]
  $region42: #{glu_layer.1} parent=0
    _
  %s6 = ssub.s32 1, %s4
  %s7 = scalar_select 0, %s6, %s4
  $region1: #{glu_layer.1} parent=0
    #allocation4 [shape = 'u8[8192]{0}', space=vmem, size = 0x2000, scoped, tag = 'input window, operand 0, single buffered']
    #allocation5 [shape = 's32[1]{0}', space=sflag, size = 0x4, scoped, tag = 'scoped memory for glu_layer.1']
    #allocation6 [shape = 's32[1]{0}', space=sflag, size = 0x4, scoped, tag = 'scoped memory for glu_layer.1']
    #allocation7 [shape = 'u8[65536]{0}', space=vmem, size = 0x10000, scoped, tag = 'input window, operand 1, single buffered']
    #allocation8 [shape = 's32[1]{0}', space=sflag, size = 0x4, scoped, tag = 'scoped memory for glu_layer.1']
    #allocation9 [shape = 'u8[65536]{0}', space=vmem, size = 0x10000, scoped, tag = 'input window, operand 2, single buffered']
    #allocation10 [shape = 'u8[8192]{0}', space=vmem, size = 0x2000, scoped, tag = 'output window, operand 0, single buffered']
    %8 = vsyncpa [#allocation5], 0
    %9 = vsyncpa [#allocation8], 0
    %10 = vsyncpa [#allocation6], 0
    // Predicated region
    $region2: #{glu_layer.1} parent=1 // pred_check
      _
    $region3: #{glu_layer.1} parent=1 // pred_check_branch
      %12 = sbr.rel (0) target = $region5
    $region4: #{glu_layer.1} parent=1 // pred_region
      %s14 = ssub.s32 256, 256
      %15 = vsyncadd [#allocation5], %s14
      %s16 = sshll.u32 [#allocation4], 4
      %s17 = int_to_ptr.vmem [resolvable:$true] %s16
      %22 = dma.hbm_to_vmem [thread:$0]  %s0, 256, %s17, [#allocation5], 128, 128, 8
    $region5: #{glu_layer.1} parent=1 // pred_fallthru
      _
    // Predicated region
    $region6: #{glu_layer.1} parent=1 // pred_check
      _
    $region7: #{glu_layer.1} parent=1 // pred_check_branch
      %24 = sbr.rel (0) target = $region9
    $region8: #{glu_layer.1} parent=1 // pred_region
      %s26 = ssub.s32 2048, 2048
      %27 = vsyncadd [#allocation8], %s26
      %s28 = sshll.u32 [#allocation7], 4
      %s29 = int_to_ptr.vmem [resolvable:$true] %s28
      %34 = dma.hbm_to_vmem [thread:$0]  %s1, 2048, %s29, [#allocation8], 128, 128, 8
    $region9: #{glu_layer.1} parent=1 // pred_fallthru
      _
    // Predicated region
    $region10: #{glu_layer.1} parent=1 // pred_check
      _
    $region11: #{glu_layer.1} parent=1 // pred_check_branch
      %36 = sbr.rel (0) target = $region13
    $region12: #{glu_layer.1} parent=1 // pred_region
      %s38 = ssub.s32 2048, 2048
      %39 = vsyncadd [#allocation8], %s38
      %s40 = sshll.u32 [#allocation9], 4
      %s41 = int_to_ptr.vmem [resolvable:$true] %s40
      %46 = dma.hbm_to_vmem [thread:$0]  %s2, 2048, %s41, [#allocation8], 128, 128, 8
    $region13: #{glu_layer.1} parent=1 // pred_fallthru
      _
    // Predicated region
    $region14: #{glu_layer.1} parent=1 // pred_check
      _
    $region15: #{glu_layer.1} parent=1 // pred_check_branch
      %48 = sbr.rel (0) target = $region17
    $region16: #{glu_layer.1} parent=1 // pred_region
      %49 = dma.done [#allocation5], 256
    $region17: #{glu_layer.1} parent=1 // pred_fallthru
      _
    // Predicated region
    $region18: #{glu_layer.1} parent=1 // pred_check
      _
    $region19: #{glu_layer.1} parent=1 // pred_check_branch
      %51 = sbr.rel (0) target = $region21
    $region20: #{glu_layer.1} parent=1 // pred_region
      %52 = dma.done [#allocation8], 2048
    $region21: #{glu_layer.1} parent=1 // pred_fallthru
      _
    // Predicated region
    $region22: #{glu_layer.1} parent=1 // pred_check
      _
    $region23: #{glu_layer.1} parent=1 // pred_check_branch
      %54 = sbr.rel (0) target = $region25
    $region24: #{glu_layer.1} parent=1 // pred_region
      %55 = dma.done [#allocation8], 2048
    $region25: #{glu_layer.1} parent=1 // pred_fallthru
      _
    %p56 = scmp.eq.s32.totalorder 0, 0
    // Predicated region
    $region26: #{glu_layer.1} parent=1 // pred_check
      %p57 = pneg %p56
    $region27: #{glu_layer.1} parent=1 // pred_check_branch
      %59 = sbr.rel (%p57) target = $region29
    $region28: #{glu_layer.1} parent=1 // pred_region
      %60 = vst [vmem:[#allocation2] sm:$0xff] 0.0
      %61 = vst [vmem:[#allocation2 + $0x8] sm:$0xff] 0.0
      %62 = vst [vmem:[#allocation3] sm:$0xff] 0.0
      %63 = vst [vmem:[#allocation3 + $0x8] sm:$0xff] 0.0
    $region29: #{glu_layer.1} parent=1 // pred_fallthru
      _
    %v64 = vld [vmem:[#allocation4] sm:$0xff]
    %v65 = vld [vmem:[#allocation4 + $0x8] sm:$0xff]
    %v66 = vld [vmem:[#allocation2] sm:$0xff]
    %v67 = vld [vmem:[#allocation2 + $0x8] sm:$0xff]
    %v68 = vld [vmem:[#allocation7] sm:$0xff]
    %v69 = vld [vmem:[#allocation7 + $0x8] sm:$0xff]
    %v70 = vld [vmem:[#allocation7 + $0x10] sm:$0xff]
    %v71 = vld [vmem:[#allocation7 + $0x18] sm:$0xff]
    %v72 = vld [vmem:[#allocation7 + $0x20] sm:$0xff]
    %v73 = vld [vmem:[#allocation7 + $0x28] sm:$0xff]
    %v74 = vld [vmem:[#allocation7 + $0x30] sm:$0xff]
    %v75 = vld [vmem:[#allocation7 + $0x38] sm:$0xff]
    %v76 = vld [vmem:[#allocation7 + $0x40] sm:$0xff]
    %v77 = vld [vmem:[#allocation7 + $0x48] sm:$0xff]
    %v78 = vld [vmem:[#allocation7 + $0x50] sm:$0xff]
    %v79 = vld [vmem:[#allocation7 + $0x58] sm:$0xff]
    %v80 = vld [vmem:[#allocation7 + $0x60] sm:$0xff]
    %v81 = vld [vmem:[#allocation7 + $0x68] sm:$0xff]
    %v82 = vld [vmem:[#allocation7 + $0x70] sm:$0xff]
    %v83 = vld [vmem:[#allocation7 + $0x78] sm:$0xff]
    %84 = vmatprep.subr.mxu0 0.0
    %85 = vmatpush1.msra.mxu0 %v68
    %86 = vmatprep.subr.mxu0 0.0
    %87 = vmatpush1.msra.mxu0 %v69
    %88 = vmatprep.subr.mxu0 0.0
    %89 = vmatpush1.msra.mxu0 %v70
    %90 = vmatprep.subr.mxu0 0.0
    %91 = vmatpush1.msra.mxu0 %v71
    %92 = vmatprep.subr.mxu0 0.0
    %93 = vmatpush1.msra.mxu0 %v72
    %94 = vmatprep.subr.mxu0 0.0
    %95 = vmatpush1.msra.mxu0 %v73
    %96 = vmatprep.subr.mxu0 0.0
    %97 = vmatpush1.msra.mxu0 %v74
    %98 = vmatprep.subr.mxu0 0.0
    %99 = vmatpush1.msra.mxu0 %v75
    %100 = vmatprep.subr.mxu0 0.0
    %101 = vmatpush1.msra.mxu0 %v76
    %102 = vmatprep.subr.mxu0 0.0
    %103 = vmatpush1.msra.mxu0 %v77
    %104 = vmatprep.subr.mxu0 0.0
    %105 = vmatpush1.msra.mxu0 %v78
    %106 = vmatprep.subr.mxu0 0.0
    %107 = vmatpush1.msra.mxu0 %v79
    %108 = vmatprep.subr.mxu0 0.0
    %109 = vmatpush1.msra.mxu0 %v80
    %110 = vmatprep.subr.mxu0 0.0
    %111 = vmatpush1.msra.mxu0 %v81
    %112 = vmatprep.subr.mxu0 0.0
    %113 = vmatpush1.msra.mxu0 %v82
    %114 = vmatprep.subr.mxu0 0.0
    %115 = vmatpush1.msra.mxu0 %v83
    %116 = vmatprep.subr.mxu0 0.0
    %117 = vmatpush1.msra.mxu0 0.0
    %118 = vmatprep.subr.mxu0 0.0
    %119 = vmatpush1.msra.mxu0 0.0
    %120 = vmatprep.subr.mxu0 0.0
    %121 = vmatpush1.msra.mxu0 0.0
    %122 = vmatprep.subr.mxu0 0.0
    %123 = vmatpush1.msra.mxu0 0.0
    %124 = vmatprep.subr.mxu0 0.0
    %125 = vmatpush1.msra.mxu0 0.0
    %126 = vmatprep.subr.mxu0 0.0
    %127 = vmatpush1.msra.mxu0 0.0
    %128 = vmatprep.subr.mxu0 0.0
    %129 = vmatpush1.msra.mxu0 0.0
    %130 = vmatprep.subr.mxu0 0.0
    %131 = vmatpush1.msra.mxu0 0.0
    %132 = vmatprep.subr.mxu0 0.0
    %133 = vmatpush1.msra.mxu0 0.0
    %134 = vmatprep.subr.mxu0 0.0
    %135 = vmatpush1.msra.mxu0 0.0
    %136 = vmatprep.subr.mxu0 0.0
    %137 = vmatpush1.msra.mxu0 0.0
    %138 = vmatprep.subr.mxu0 0.0
    %139 = vmatpush1.msra.mxu0 0.0
    %140 = vmatprep.subr.mxu0 0.0
    %141 = vmatpush1.msra.mxu0 0.0
    %142 = vmatprep.subr.mxu0 0.0
    %143 = vmatpush1.msra.mxu0 0.0
    %144 = vmatprep.subr.mxu0 0.0
    %145 = vmatpush1.msra.mxu0 0.0
    %146 = vmatprep.subr.mxu0 0.0
    %147 = vmatpush1.msra.mxu0 0.0
    %148 = vmatprep.mubr.f32.mxu0 0.0
    %149 = vmatmul.mubr.f32.gmra.mrb[0].mxu0 %v64
    %v150 = vpop.f32.mrb[0].mxu0
    %v151 = vadd.f32 0.0, %v150
    %v152 = vpop.f32.mrb[0].mxu0
    %153 = vmatprep.mubr.f32.mxu0 0.0
    %154 = vmatmul.mubr.f32.gmra.mrb[0].mxu0 %v65
    %v155 = vpop.f32.mrb[0].mxu0
    %v156 = vadd.f32 0.0, %v155
    %v157 = vpop.f32.mrb[0].mxu0
    %158 = vdwg.mxu0
    %v159 = vadd.f32 %v66, %v151
    %v160 = vadd.f32 %v67, %v156
    %161 = vst [vmem:[#allocation2] sm:$0xff] %v159
    %162 = vst [vmem:[#allocation2 + $0x8] sm:$0xff] %v160
    %v163 = vld [vmem:[#allocation3] sm:$0xff]
    %v164 = vld [vmem:[#allocation3 + $0x8] sm:$0xff]
    %v165 = vld [vmem:[#allocation9] sm:$0xff]
    %v166 = vld [vmem:[#allocation9 + $0x8] sm:$0xff]
    %v167 = vld [vmem:[#allocation9 + $0x10] sm:$0xff]
    %v168 = vld [vmem:[#allocation9 + $0x18] sm:$0xff]
    %v169 = vld [vmem:[#allocation9 + $0x20] sm:$0xff]
    %v170 = vld [vmem:[#allocation9 + $0x28] sm:$0xff]
    %v171 = vld [vmem:[#allocation9 + $0x30] sm:$0xff]
    %v172 = vld [vmem:[#allocation9 + $0x38] sm:$0xff]
    %v173 = vld [vmem:[#allocation9 + $0x40] sm:$0xff]
    %v174 = vld [vmem:[#allocation9 + $0x48] sm:$0xff]
    %v175 = vld [vmem:[#allocation9 + $0x50] sm:$0xff]
    %v176 = vld [vmem:[#allocation9 + $0x58] sm:$0xff]
    %v177 = vld [vmem:[#allocation9 + $0x60] sm:$0xff]
    %v178 = vld [vmem:[#allocation9 + $0x68] sm:$0xff]
    %v179 = vld [vmem:[#allocation9 + $0x70] sm:$0xff]
    %v180 = vld [vmem:[#allocation9 + $0x78] sm:$0xff]
    %181 = vmatprep.subr.mxu0 0.0
    %182 = vmatpush1.msra.mxu0 %v165
    %183 = vmatprep.subr.mxu0 0.0
    %184 = vmatpush1.msra.mxu0 %v166
    %185 = vmatprep.subr.mxu0 0.0
    %186 = vmatpush1.msra.mxu0 %v167
    %187 = vmatprep.subr.mxu0 0.0
    %188 = vmatpush1.msra.mxu0 %v168
    %189 = vmatprep.subr.mxu0 0.0
    %190 = vmatpush1.msra.mxu0 %v169
    %191 = vmatprep.subr.mxu0 0.0
    %192 = vmatpush1.msra.mxu0 %v170
    %193 = vmatprep.subr.mxu0 0.0
    %194 = vmatpush1.msra.mxu0 %v171
    %195 = vmatprep.subr.mxu0 0.0
    %196 = vmatpush1.msra.mxu0 %v172
    %197 = vmatprep.subr.mxu0 0.0
    %198 = vmatpush1.msra.mxu0 %v173
    %199 = vmatprep.subr.mxu0 0.0
    %200 = vmatpush1.msra.mxu0 %v174
    %201 = vmatprep.subr.mxu0 0.0
    %202 = vmatpush1.msra.mxu0 %v175
    %203 = vmatprep.subr.mxu0 0.0
    %204 = vmatpush1.msra.mxu0 %v176
    %205 = vmatprep.subr.mxu0 0.0
    %206 = vmatpush1.msra.mxu0 %v177
    %207 = vmatprep.subr.mxu0 0.0
    %208 = vmatpush1.msra.mxu0 %v178
    %209 = vmatprep.subr.mxu0 0.0
    %210 = vmatpush1.msra.mxu0 %v179
    %211 = vmatprep.subr.mxu0 0.0
    %212 = vmatpush1.msra.mxu0 %v180
    %213 = vmatprep.subr.mxu0 0.0
    %214 = vmatpush1.msra.mxu0 0.0
    %215 = vmatprep.subr.mxu0 0.0
    %216 = vmatpush1.msra.mxu0 0.0
    %217 = vmatprep.subr.mxu0 0.0
    %218 = vmatpush1.msra.mxu0 0.0
    %219 = vmatprep.subr.mxu0 0.0
    %220 = vmatpush1.msra.mxu0 0.0
    %221 = vmatprep.subr.mxu0 0.0
    %222 = vmatpush1.msra.mxu0 0.0
    %223 = vmatprep.subr.mxu0 0.0
    %224 = vmatpush1.msra.mxu0 0.0
    %225 = vmatprep.subr.mxu0 0.0
    %226 = vmatpush1.msra.mxu0 0.0
    %227 = vmatprep.subr.mxu0 0.0
    %228 = vmatpush1.msra.mxu0 0.0
    %229 = vmatprep.subr.mxu0 0.0
    %230 = vmatpush1.msra.mxu0 0.0
    %231 = vmatprep.subr.mxu0 0.0
    %232 = vmatpush1.msra.mxu0 0.0
    %233 = vmatprep.subr.mxu0 0.0
    %234 = vmatpush1.msra.mxu0 0.0
    %235 = vmatprep.subr.mxu0 0.0
    %236 = vmatpush1.msra.mxu0 0.0
    %237 = vmatprep.subr.mxu0 0.0
    %238 = vmatpush1.msra.mxu0 0.0
    %239 = vmatprep.subr.mxu0 0.0
    %240 = vmatpush1.msra.mxu0 0.0
    %241 = vmatprep.subr.mxu0 0.0
    %242 = vmatpush1.msra.mxu0 0.0
    %243 = vmatprep.subr.mxu0 0.0
    %244 = vmatpush1.msra.mxu0 0.0
    %245 = vmatprep.mubr.f32.mxu0 0.0
    %246 = vmatmul.mubr.f32.gmra.mrb[0].mxu0 %v64
    %v247 = vpop.f32.mrb[0].mxu0
    %v248 = vadd.f32 0.0, %v247
    %v249 = vpop.f32.mrb[0].mxu0
    %250 = vmatprep.mubr.f32.mxu0 0.0
    %251 = vmatmul.mubr.f32.gmra.mrb[0].mxu0 %v65
    %v252 = vpop.f32.mrb[0].mxu0
    %v253 = vadd.f32 0.0, %v252
    %v254 = vpop.f32.mrb[0].mxu0
    %255 = vdwg.mxu0
    %v256 = vadd.f32 %v163, %v248
    %v257 = vadd.f32 %v164, %v253
    %258 = vst [vmem:[#allocation3] sm:$0xff] %v256
    %259 = vst [vmem:[#allocation3 + $0x8] sm:$0xff] %v257
    // Predicated region
    $region30: #{glu_layer.1} parent=1 // pred_check
      %p260 = pneg %p56
    $region31: #{glu_layer.1} parent=1 // pred_check_branch
      %262 = sbr.rel (%p260) target = $region33
    $region32: #{glu_layer.1} parent=1 // pred_region
      %v263 = vld [vmem:[#allocation2] sm:$0xff]
      %v264 = vld [vmem:[#allocation2 + $0x8] sm:$0xff]
      %v265 = vld [vmem:[#allocation3] sm:$0xff]
      %v266 = vld [vmem:[#allocation3 + $0x8] sm:$0xff]
      %v267 = vxor.u32 %v265, 2147483648
      %v268 = vxor.u32 %v266, 2147483648
      %v269 = vmul.f32 %v267, 1.442695
      %v270 = vpow.pop %v269
      %v271 = vmul.f32 %v268, 1.442695
      %v272 = vpow.pop %v271
      %v273 = vadd.f32 %v270, 1.0
      %v274 = vadd.f32 %v272, 1.0
      %v275 = vrcp.pop %v273
      %v276 = vmul.f32 1.0, %v275
      %v277 = vrcp.pop %v274
      %v278 = vmul.f32 1.0, %v277
      %v279 = vmul.f32 %v263, %v276
      %v280 = vmul.f32 %v264, %v278
      %281 = vst [vmem:[#allocation10] sm:$0xff] %v279
      %282 = vst [vmem:[#allocation10 + $0x8] sm:$0xff] %v280
    $region33: #{glu_layer.1} parent=1 // pred_fallthru
      _
    // Predicated region
    $region34: #{glu_layer.1} parent=1 // pred_check
      _
    $region35: #{glu_layer.1} parent=1 // pred_check_branch
      %284 = sbr.rel (0) target = $region37
    $region36: #{glu_layer.1} parent=1 // pred_region
      %s286 = ssub.s32 256, 256
      %287 = vsyncadd [#allocation6], %s286
      %s288 = sshll.u32 [#allocation10], 4
      %s289 = int_to_ptr.vmem [resolvable:$true] %s288
      %294 = dma.vmem_to_hbm [thread:$0]  %s289, 256, %s3, [#allocation6], 128, 128, 8
    $region37: #{glu_layer.1} parent=1 // pred_fallthru
      _
    // Predicated region
    $region38: #{glu_layer.1} parent=1 // pred_check
      _
    $region39: #{glu_layer.1} parent=1 // pred_check_branch
      %296 = sbr.rel (0) target = $region41
    $region40: #{glu_layer.1} parent=1 // pred_region
      %297 = dma.done [#allocation6], 256
    $region41: #{glu_layer.1} parent=1 // pred_fallthru
      _
    %298 = vsyncpa [#allocation5], 1
    %299 = vsyncpa [#allocation8], 1
    %300 = vsyncpa [#allocation6], 1

</llo_original>
